<compile_context>
chip_gen: v7x
topology: tpu7x:2x2x1
jax: 0.10.0
libtpu: 0.0.40
codegen_flags: <defaults>
</compile_context>

<pallas_src>
import jax
import jax.numpy as jnp
from jax.experimental import pallas as pl
from jax.experimental.pallas import tpu as pltpu


C_IN, C_BODY, C_ENH, C_FUSE, NUM_CLASSES = 4, 8, 16, 16, 10
K_BODY = 9 * C_IN          # 36 = 3*3*C_IN im2col contraction size
K_PAD = 40                 # padded to a sublane multiple of 8; row 36 = ones (bias) row

# Packed-weight slab layout (row blocks 8-aligned, 128 lanes wide).
RB = 16                    # body block rows:    8 conv outs + 1 ones channel + 7 zero pad
RE = 24                    # enhance block rows: 16 outs     + 1 ones channel + 7 zero pad
RH = 16                    # fused fusion+head:  10 classes               + 6 zero pad
OFF_B, OFF_E, OFF_H = 0, RB, RB + RE          # 0, 16, 40
SLAB_ROWS = OFF_H + RH                        # 56
SLAB_LANES = 128


# ---------------------------------------------------------------------------
# Fused Pallas kernel: body -> enhance -> pool -> (fusion+head folded)
# All activations kept in transposed [C, M] (lane-dense) layout; every bias
# rides the MXU via the ones channel, so the body is 4 matmuls + 2 ReLUs.
# ---------------------------------------------------------------------------
def _gmodel_kernel(at_ref, w_ref, pool_ref, o_ref):
    # Static slices of the packed weight slab (free views of the VMEM ref).
    wb = w_ref[OFF_B:OFF_B + RB, 0:K_PAD]        # (16, 40)
    we = w_ref[OFF_E:OFF_E + RE, 0:RB]           # (24, 16)
    wfh = w_ref[OFF_H:OFF_H + RH, 0:RE]          # (16, 24)

    # backbone: 3x3 conv (pre-built transposed patch matrix) + ReLU.
    # Row 8 of `body` is the all-ones channel (selected from at's ones row).
    body = jnp.maximum(
        jnp.dot(wb, at_ref[...], preferred_element_type=jnp.float32), 0.0)   # (16, M)

    # enhance: 1x1 conv + ReLU; bias via the ones channel, ones propagated.
    enh = jnp.maximum(
        jnp.dot(we, body, preferred_element_type=jnp.float32), 0.0)          # (24, M)

    # global average pool per image as a matmul with the host-built
    # block-averaging matrix (pure MXU; no in-kernel iota/select).
    pooled = jnp.dot(enh, pool_ref[...], preferred_element_type=jnp.float32)  # (24, N)

    # fusion + head folded into one affine map; bias via the pooled ones row.
    logits = jnp.dot(wfh, pooled, preferred_element_type=jnp.float32)          # (16, N)
    o_ref[...] = logits[0:NUM_CLASSES, :]                                      # (10, N)


# ---------------------------------------------------------------------------
# Host-side glue (fused by XLA under jit)
# ---------------------------------------------------------------------------
def _im2col_t(x_nchw):
    """NCHW image -> transposed, K-padded patch matrix (K_PAD, N*H*W).

    Row order k = (kh*3 + kw)*C_IN + cin (cin fastest); row K_BODY is the
    all-ones bias row; remaining rows are zero padding.
    """
    N, C, H, W = x_nchw.shape
    xp = jnp.pad(x_nchw, ((0, 0), (0, 0), (1, 1), (1, 1)))
    taps = [xp[:, :, dh:dh + H, dw:dw + W] for dh in range(3) for dw in range(3)]
    at = jnp.stack(taps, axis=0)                              # (9, N, C, H, W)
    at = at.transpose(0, 2, 1, 3, 4).reshape(K_BODY, N * H * W)
    m = N * H * W
    ones = jnp.ones((1, m), jnp.float32)
    zeros = jnp.zeros((K_PAD - K_BODY - 1, m), jnp.float32)
    # TODO(synk): patch extraction could move inside the kernel (shifted views
    # of a VMEM-resident padded tile) to avoid the 9x-expanded HBM round-trip.
    return jnp.concatenate([at.astype(jnp.float32), ones, zeros], axis=0)


def _pack_weights(params):
    """All weights/biases packed into one (SLAB_ROWS, 128) f32 slab."""
    # body block (RB, K_PAD): conv weights, bias column, ones pass-through row.
    wb = jnp.zeros((RB, K_PAD), jnp.float32)
    wb = wb.at[0:C_BODY, 0:K_BODY].set(params["body_w"].T.astype(jnp.float32))
    wb = wb.at[0:C_BODY, K_BODY].set(params["body_b"].astype(jnp.float32))
    wb = wb.at[C_BODY, K_BODY].set(1.0)            # propagate the ones row

    # enhance block (RE, RB): weights, bias column (reads body ones channel),
    # ones pass-through row.
    we = jnp.zeros((RE, RB), jnp.float32)
    we = we.at[0:C_ENH, 0:C_BODY].set(params["enh_w"].T.astype(jnp.float32))
    we = we.at[0:C_ENH, C_BODY].set(params["enh_b"].astype(jnp.float32))
    we = we.at[C_ENH, C_BODY].set(1.0)             # propagate the ones channel

    # fusion + head folded into one affine map (exact: no nonlinearity between).
    wfh_w = params["head_w"].T.astype(jnp.float32) @ params["fuse_w"].T.astype(jnp.float32)
    wfh_b = (params["head_w"].T.astype(jnp.float32) @ params["fuse_b"].astype(jnp.float32)
             + params["head_b"].astype(jnp.float32))
    wfh = jnp.zeros((RH, RE), jnp.float32)
    wfh = wfh.at[0:NUM_CLASSES, 0:C_ENH].set(wfh_w)
    wfh = wfh.at[0:NUM_CLASSES, C_ENH].set(wfh_b)  # reads the pooled ones row (== 1)

    slab = jnp.zeros((SLAB_ROWS, SLAB_LANES), jnp.float32)
    slab = slab.at[OFF_B:OFF_B + RB, 0:K_PAD].set(wb)
    slab = slab.at[OFF_E:OFF_E + RE, 0:RB].set(we)
    slab = slab.at[OFF_H:OFF_H + RH, 0:RE].set(wfh)
    return slab


def _pool_matrix(n, hw):
    """(M, N) block-averaging matrix: column b averages image b's hw positions."""
    m = n * hw
    row_img = jnp.arange(m, dtype=jnp.int32)[:, None] // hw
    col = jnp.arange(n, dtype=jnp.int32)[None, :]
    return jnp.where(row_img == col, jnp.float32(1.0 / hw), jnp.float32(0.0))


# ---------------------------------------------------------------------------
# Parameters (deterministic, in-script)
# ---------------------------------------------------------------------------
def init_params(key):
    ks = jax.random.split(key, 8)
    scale = 0.1
    return {
        "body_w": scale * jax.random.normal(ks[0], (3 * 3 * C_IN, C_BODY), jnp.float32),
        "body_b": scale * jax.random.normal(ks[1], (C_BODY,), jnp.float32),
        "enh_w": scale * jax.random.normal(ks[2], (C_BODY, C_ENH), jnp.float32),
        "enh_b": scale * jax.random.normal(ks[3], (C_ENH,), jnp.float32),
        "fuse_w": scale * jax.random.normal(ks[4], (C_ENH, C_FUSE), jnp.float32),
        "fuse_b": scale * jax.random.normal(ks[5], (C_FUSE,), jnp.float32),
        "head_w": scale * jax.random.normal(ks[6], (C_FUSE, NUM_CLASSES), jnp.float32),
        "head_b": scale * jax.random.normal(ks[7], (NUM_CLASSES,), jnp.float32),
    }


# ---------------------------------------------------------------------------
# GModel forward: body -> enhance -> fusion -> head (one fused Pallas call)
# ---------------------------------------------------------------------------
@jax.jit
def gmodel_forward(params, img_nchw):
    N, _, H, W = img_nchw.shape
    hw = H * W
    m = N * hw

    at = _im2col_t(img_nchw)            # (K_PAD, M)
    slab = _pack_weights(params)        # (SLAB_ROWS, 128)
    pool = _pool_matrix(N, hw)          # (M, N)

    cost = pl.CostEstimate(
        flops=2 * (RB * K_PAD * m + RE * RB * m + RE * m * N + RH * RE * N),
        transcendentals=0,
        bytes_accessed=4 * (at.size + slab.size + pool.size + NUM_CLASSES * N),
    )

    vmem = pl.BlockSpec(memory_space=pltpu.MemorySpace.VMEM)
    logits_t = pl.pallas_call(
        _gmodel_kernel,
        out_shape=jax.ShapeDtypeStruct((NUM_CLASSES, N), jnp.float32),
        in_specs=[vmem, vmem, vmem],
        out_specs=vmem,
        cost_estimate=cost,
    )(at, slab, pool)

    # TODO(synk): GModel's `collect` brick is built in __init__ but never
    # called in forward(), so it is intentionally omitted here.
    return logits_t.T                   # (N, NUM_CLASSES)


if __name__ == "__main__":
    key = jax.random.PRNGKey(0)
    k_x, k_p = jax.random.split(key)

    # PyTorch-style NCHW input: batch=2, channels=4, spatial=16x16
    img = jax.random.normal(k_x, (2, C_IN, 16, 16), jnp.float32)
    params = init_params(k_p)

    out = gmodel_forward(params, img)
    out = jax.block_until_ready(out)
    assert out.shape == (2, NUM_CLASSES), out.shape
    assert jnp.all(jnp.isfinite(out))
    print("KERNEL_OK")
</pallas_src>

<mosaic_0001>
module attributes {stable_mosaic.version = 11 : i64} {
  func.func @_gmodel_kernel(%arg0: memref<40x512xf32, #tpu.memory_space<vmem>>, %arg1: memref<56x128xf32, #tpu.memory_space<vmem>>, %arg2: memref<512x2xf32, #tpu.memory_space<vmem>>, %arg3: memref<10x2xf32, #tpu.memory_space<vmem>>) attributes {dimension_semantics = [], scalar_prefetch = 0 : i64, scratch_operands = 0 : i64, tpu.core_type = #tpu.core_type<tc>} {
    %c0 = arith.constant 0 : index
    %c0_0 = arith.constant 0 : index
    %0 = vector.load %arg1[%c0, %c0_0] : memref<56x128xf32, #tpu.memory_space<vmem>>, vector<16x40xf32>
    %c16 = arith.constant 16 : index
    %c0_1 = arith.constant 0 : index
    %1 = vector.load %arg1[%c16, %c0_1] : memref<56x128xf32, #tpu.memory_space<vmem>>, vector<24x16xf32>
    %c40 = arith.constant 40 : index
    %c0_2 = arith.constant 0 : index
    %2 = vector.load %arg1[%c40, %c0_2] : memref<56x128xf32, #tpu.memory_space<vmem>>, vector<16x24xf32>
    %c0_3 = arith.constant 0 : index
    %c0_4 = arith.constant 0 : index
    %3 = vector.load %arg0[%c0_3, %c0_4] : memref<40x512xf32, #tpu.memory_space<vmem>>, vector<40x512xf32>
    %cst = arith.constant dense<0.000000e+00> : vector<16x512xf32>
    %4 = tpu.matmul %0, %3, %cst {dimension_numbers = #tpu.dot_dimension_numbers<[1], [0], [0], [1], [0, 0, 1, 1], [], []>} : vector<16x40xf32>, vector<40x512xf32>, vector<16x512xf32> -> vector<16x512xf32>
    %cst_5 = arith.constant 0.000000e+00 : f32
    %5 = vector.broadcast %cst_5 : f32 to vector<16x512xf32>
    %6 = arith.maximumf %4, %5 : vector<16x512xf32>
    %cst_6 = arith.constant dense<0.000000e+00> : vector<24x512xf32>
    %7 = tpu.matmul %1, %6, %cst_6 {dimension_numbers = #tpu.dot_dimension_numbers<[1], [0], [0], [1], [0, 0, 1, 1], [], []>} : vector<24x16xf32>, vector<16x512xf32>, vector<24x512xf32> -> vector<24x512xf32>
    %cst_7 = arith.constant 0.000000e+00 : f32
    %8 = vector.broadcast %cst_7 : f32 to vector<24x512xf32>
    %9 = arith.maximumf %7, %8 : vector<24x512xf32>
    %c0_8 = arith.constant 0 : index
    %c0_9 = arith.constant 0 : index
    %10 = vector.load %arg2[%c0_8, %c0_9] : memref<512x2xf32, #tpu.memory_space<vmem>>, vector<512x2xf32>
    %cst_10 = arith.constant dense<0.000000e+00> : vector<24x2xf32>
    %11 = tpu.matmul %9, %10, %cst_10 {dimension_numbers = #tpu.dot_dimension_numbers<[1], [0], [0], [1], [0, 0, 1, 1], [], []>} : vector<24x512xf32>, vector<512x2xf32>, vector<24x2xf32> -> vector<24x2xf32>
    %cst_11 = arith.constant dense<0.000000e+00> : vector<16x2xf32>
    %12 = tpu.matmul %2, %11, %cst_11 {dimension_numbers = #tpu.dot_dimension_numbers<[1], [0], [0], [1], [0, 0, 1, 1], [], []>} : vector<16x24xf32>, vector<24x2xf32>, vector<16x2xf32> -> vector<16x2xf32>
    %13 = vector.extract_strided_slice %12 {offsets = [0, 0], sizes = [10, 2], strides = [1, 1]} : vector<16x2xf32> to vector<10x2xf32>
    %c0_12 = arith.constant 0 : index
    %c0_13 = arith.constant 0 : index
    %14 = vector.load %arg3[%c0_12, %c0_13] : memref<10x2xf32, #tpu.memory_space<vmem>>, vector<10x2xf32>
    tpu.vector_store %arg3[%c0_12, %c0_13], %13 {strides = array<i32>} : memref<10x2xf32, #tpu.memory_space<vmem>>, vector<10x2xf32>,
    return
  }
}

</mosaic_0001>

<llo_original>
// kernel: gmodel_forward.1
$region0: #{gmodel_forward.1}
  #allocation0 [shape = 'u32[]', space=smem, size = 0x4, offset = 0x4, fixed_abs, tag = 'smem constant byte address 0x4 - core index']
  #allocation1 [shape = 'u32[144,128]{1,0:T(1,128)}', space=vmem, size = 0x12000, scoped, tag = 'internal scratch']
  %s0 = inlined_call_operand.vmem [shape: f32[40,512], index: 0, kind: input, shape index: {}]
  %s1 = inlined_call_operand.vmem [shape: f32[56,128], index: 1, kind: input, shape index: {}]
  %s2 = inlined_call_operand.vmem [shape: f32[512,2], index: 2, kind: input, shape index: {}]
  %s3 = inlined_call_operand.vmem [shape: f32[10,2], index: 3, kind: output, shape index: {}]
  %s4 = sld [smem:[#allocation0]]
  $region22: #{gmodel_forward.1} parent=0
    _
  %s6 = ssub.s32 1, %s4
  %s7 = scalar_select 0, %s6, %s4
  // Predicated region
  $region2: #{gmodel_forward.1} parent=0 // pred_check
    _
  $region3: #{gmodel_forward.1} parent=0 // pred_check_branch
    %9 = sbr.rel (0) target = $region5
  $region4: #{gmodel_forward.1} parent=0 // pred_region
    _
  $region5: #{gmodel_forward.1} parent=0 // pred_fallthru
    _
  // Predicated region
  $region6: #{gmodel_forward.1} parent=0 // pred_check
    _
  $region7: #{gmodel_forward.1} parent=0 // pred_check_branch
    %11 = sbr.rel (0) target = $region9
  $region8: #{gmodel_forward.1} parent=0 // pred_region
    _
  $region9: #{gmodel_forward.1} parent=0 // pred_fallthru
    _
  // Predicated region
  $region10: #{gmodel_forward.1} parent=0 // pred_check
    _
  $region11: #{gmodel_forward.1} parent=0 // pred_check_branch
    %13 = sbr.rel (0) target = $region13
  $region12: #{gmodel_forward.1} parent=0 // pred_region
    _
  $region13: #{gmodel_forward.1} parent=0 // pred_fallthru
    _
  %v14 = vld [vmem:[%s1] sm:$0xff]
  %v15 = vld [vmem:[%s1 + $0x8] sm:$0xff]
  %v16 = vld [vmem:[%s1 + $0x10] sm:$0xff]
  %v17 = vld [vmem:[%s1 + $0x18] sm:$0xff]
  %v18 = vld [vmem:[%s1 + $0x20] sm:$0xff]
  %v19 = vld [vmem:[%s1 + $0x28] sm:$0xff]
  %v20 = vld [vmem:[%s1 + $0x30] sm:$0xff]
  %v21 = vld [vmem:[%s0] sm:$0xff]
  %v22 = vld [vmem:[%s0 + $0x8] sm:$0xff]
  %v23 = vld [vmem:[%s0 + $0x10] sm:$0xff]
  %v24 = vld [vmem:[%s0 + $0x18] sm:$0xff]
  %v25 = vld [vmem:[%s0 + $0x20] sm:$0xff]
  %v26 = vld [vmem:[%s0 + $0x28] sm:$0xff]
  %v27 = vld [vmem:[%s0 + $0x30] sm:$0xff]
  %v28 = vld [vmem:[%s0 + $0x38] sm:$0xff]
  %v29 = vld [vmem:[%s0 + $0x40] sm:$0xff]
  %v30 = vld [vmem:[%s0 + $0x48] sm:$0xff]
  %v31 = vld [vmem:[%s0 + $0x50] sm:$0xff]
  %v32 = vld [vmem:[%s0 + $0x58] sm:$0xff]
  %v33 = vld [vmem:[%s0 + $0x60] sm:$0xff]
  %v34 = vld [vmem:[%s0 + $0x68] sm:$0xff]
  %v35 = vld [vmem:[%s0 + $0x70] sm:$0xff]
  %v36 = vld [vmem:[%s0 + $0x78] sm:$0xff]
  %v37 = vld [vmem:[%s0 + $0x80] sm:$0xff]
  %v38 = vld [vmem:[%s0 + $0x88] sm:$0xff]
  %v39 = vld [vmem:[%s0 + $0x90] sm:$0xff]
  %v40 = vld [vmem:[%s0 + $0x98] sm:$0xff]
  %vm41 = vcmask 326656
  %v43 = vsel %vm41, %v14, 0
  %v46 = vsel %vm41, %v15, 0
  %48 = vmatprep.subr.mxu0 %v22
  %49 = vmatpush1.msra.mxu0 %v21
  %50 = vmatprep.subr.mxu0 %v26
  %51 = vmatpush1.msra.mxu0 %v25
  %52 = vmatprep.subr.mxu0 %v30
  %53 = vmatpush1.msra.mxu0 %v29
  %54 = vmatprep.subr.mxu0 %v34
  %55 = vmatpush1.msra.mxu0 %v33
  %56 = vmatprep.subr.mxu0 %v38
  %57 = vmatpush1.msra.mxu0 %v37
  %58 = vmatprep.subr.mxu0 0.0
  %59 = vmatpush1.msra.mxu0 0.0
  %60 = vmatprep.subr.mxu0 0.0
  %61 = vmatpush1.msra.mxu0 0.0
  %62 = vmatprep.subr.mxu0 0.0
  %63 = vmatpush1.msra.mxu0 0.0
  %64 = vmatprep.subr.mxu0 0.0
  %65 = vmatpush1.msra.mxu0 0.0
  %66 = vmatprep.subr.mxu0 0.0
  %67 = vmatpush1.msra.mxu0 0.0
  %68 = vmatprep.subr.mxu0 0.0
  %69 = vmatpush1.msra.mxu0 0.0
  %70 = vmatprep.subr.mxu0 0.0
  %71 = vmatpush1.msra.mxu0 0.0
  %72 = vmatprep.subr.mxu0 0.0
  %73 = vmatpush1.msra.mxu0 0.0
  %74 = vmatprep.subr.mxu0 0.0
  %75 = vmatpush1.msra.mxu0 0.0
  %76 = vmatprep.subr.mxu0 0.0
  %77 = vmatpush1.msra.mxu0 0.0
  %78 = vmatprep.subr.mxu0 0.0
  %79 = vmatpush1.msra.mxu0 0.0
  %80 = vmatprep.subr.mxu0 0.0
  %81 = vmatpush1.msra.mxu0 0.0
  %82 = vmatprep.subr.mxu0 0.0
  %83 = vmatpush1.msra.mxu0 0.0
  %84 = vmatprep.subr.mxu0 0.0
  %85 = vmatpush1.msra.mxu0 0.0
  %86 = vmatprep.subr.mxu0 0.0
  %87 = vmatpush1.msra.mxu0 0.0
  %88 = vmatprep.subr.mxu0 0.0
  %89 = vmatpush1.msra.mxu0 0.0
  %90 = vmatprep.subr.mxu0 0.0
  %91 = vmatpush1.msra.mxu0 0.0
  %92 = vmatprep.subr.mxu0 0.0
  %93 = vmatpush1.msra.mxu0 0.0
  %94 = vmatprep.subr.mxu0 0.0
  %95 = vmatpush1.msra.mxu0 0.0
  %96 = vmatprep.subr.mxu0 0.0
  %97 = vmatpush1.msra.mxu0 0.0
  %98 = vmatprep.subr.mxu0 0.0
  %99 = vmatpush1.msra.mxu0 0.0
  %100 = vmatprep.subr.mxu0 0.0
  %101 = vmatpush1.msra.mxu0 0.0
  %102 = vmatprep.subr.mxu0 0.0
  %103 = vmatpush1.msra.mxu0 0.0
  %104 = vmatprep.subr.mxu0 0.0
  %105 = vmatpush1.msra.mxu0 0.0
  %106 = vmatprep.subr.mxu0 0.0
  %107 = vmatpush1.msra.mxu0 0.0
  %108 = vmatprep.subr.mxu0 0.0
  %109 = vmatpush1.msra.mxu0 0.0
  %110 = vmatprep.subr.mxu0 0.0
  %111 = vmatpush1.msra.mxu0 0.0
  %112 = vmatprep.mubr.f32.mxu0 0.0
  %113 = vmatmul.mubr.f32.gmra.mrb[0].mxu0 %v43
  %v114 = vpop.f32.mrb[0].mxu0
  %v115 = vadd.f32 0.0, %v114
  %v116 = vpop.f32.mrb[0].mxu0
  %v117 = vadd.f32 0.0, %v116
  %118 = vmatprep.mubr.f32.mxu0 0.0
  %119 = vmatmul.mubr.f32.gmra.mrb[0].mxu0 %v46
  %v120 = vpop.f32.mrb[0].mxu0
  %v121 = vadd.f32 0.0, %v120
  %v122 = vpop.f32.mrb[0].mxu0
  %v123 = vadd.f32 0.0, %v122
  %124 = vdwg.mxu0
  %125 = vmatprep.subr.mxu0 %v24
  %126 = vmatpush1.msra.mxu0 %v23
  %127 = vmatprep.subr.mxu0 %v28
  %128 = vmatpush1.msra.mxu0 %v27
  %129 = vmatprep.subr.mxu0 %v32
  %130 = vmatpush1.msra.mxu0 %v31
  %131 = vmatprep.subr.mxu0 %v36
  %132 = vmatpush1.msra.mxu0 %v35
  %133 = vmatprep.subr.mxu0 %v40
  %134 = vmatpush1.msra.mxu0 %v39
  %135 = vmatprep.subr.mxu0 0.0
  %136 = vmatpush1.msra.mxu0 0.0
  %137 = vmatprep.subr.mxu0 0.0
  %138 = vmatpush1.msra.mxu0 0.0
  %139 = vmatprep.subr.mxu0 0.0
  %140 = vmatpush1.msra.mxu0 0.0
  %141 = vmatprep.subr.mxu0 0.0
  %142 = vmatpush1.msra.mxu0 0.0
  %143 = vmatprep.subr.mxu0 0.0
  %144 = vmatpush1.msra.mxu0 0.0
  %145 = vmatprep.subr.mxu0 0.0
  %146 = vmatpush1.msra.mxu0 0.0
  %147 = vmatprep.subr.mxu0 0.0
  %148 = vmatpush1.msra.mxu0 0.0
  %149 = vmatprep.subr.mxu0 0.0
  %150 = vmatpush1.msra.mxu0 0.0
  %151 = vmatprep.subr.mxu0 0.0
  %152 = vmatpush1.msra.mxu0 0.0
  %153 = vmatprep.subr.mxu0 0.0
  %154 = vmatpush1.msra.mxu0 0.0
  %155 = vmatprep.subr.mxu0 0.0
  %156 = vmatpush1.msra.mxu0 0.0
  %157 = vmatprep.subr.mxu0 0.0
  %158 = vmatpush1.msra.mxu0 0.0
  %159 = vmatprep.subr.mxu0 0.0
  %160 = vmatpush1.msra.mxu0 0.0
  %161 = vmatprep.subr.mxu0 0.0
  %162 = vmatpush1.msra.mxu0 0.0
  %163 = vmatprep.subr.mxu0 0.0
  %164 = vmatpush1.msra.mxu0 0.0
  %165 = vmatprep.subr.mxu0 0.0
  %166 = vmatpush1.msra.mxu0 0.0
  %167 = vmatprep.subr.mxu0 0.0
  %168 = vmatpush1.msra.mxu0 0.0
  %169 = vmatprep.subr.mxu0 0.0
  %170 = vmatpush1.msra.mxu0 0.0
  %171 = vmatprep.subr.mxu0 0.0
  %172 = vmatpush1.msra.mxu0 0.0
  %173 = vmatprep.subr.mxu0 0.0
  %174 = vmatpush1.msra.mxu0 0.0
  %175 = vmatprep.subr.mxu0 0.0
  %176 = vmatpush1.msra.mxu0 0.0
  %177 = vmatprep.subr.mxu0 0.0
  %178 = vmatpush1.msra.mxu0 0.0
  %179 = vmatprep.subr.mxu0 0.0
  %180 = vmatpush1.msra.mxu0 0.0
  %181 = vmatprep.subr.mxu0 0.0
  %182 = vmatpush1.msra.mxu0 0.0
  %183 = vmatprep.subr.mxu0 0.0
  %184 = vmatpush1.msra.mxu0 0.0
  %185 = vmatprep.subr.mxu0 0.0
  %186 = vmatpush1.msra.mxu0 0.0
  %187 = vmatprep.subr.mxu0 0.0
  %188 = vmatpush1.msra.mxu0 0.0
  %189 = vmatprep.mubr.f32.mxu0 0.0
  %190 = vmatmul.mubr.f32.gmra.mrb[0].mxu0 %v43
  %v191 = vpop.f32.mrb[0].mxu0
  %v192 = vadd.f32 0.0, %v191
  %v193 = vpop.f32.mrb[0].mxu0
  %v194 = vadd.f32 0.0, %v193
  %195 = vmatprep.mubr.f32.mxu0 0.0
  %196 = vmatmul.mubr.f32.gmra.mrb[0].mxu0 %v46
  %v197 = vpop.f32.mrb[0].mxu0
  %v198 = vadd.f32 0.0, %v197
  %v199 = vpop.f32.mrb[0].mxu0
  %v200 = vadd.f32 0.0, %v199
  %201 = vdwg.mxu0
  %v202 = vmax.f32 %v115, 0.0
  %v203 = vmax.f32 %v117, 0.0
  %v204 = vmax.f32 %v192, 0.0
  %v205 = vmax.f32 %v194, 0.0
  %v206 = vmax.f32 %v121, 0.0
  %v207 = vmax.f32 %v123, 0.0
  %v208 = vmax.f32 %v198, 0.0
  %v209 = vmax.f32 %v200, 0.0
  %vm210 = vcmask 130048
  %v212 = vsel %vm210, %v16, 0
  %v215 = vsel %vm210, %v17, 0
  %v218 = vsel %vm210, %v18, 0
  %220 = vmatprep.subr.mxu0 %v203
  %221 = vmatpush1.msra.mxu0 %v202
  %222 = vmatprep.subr.mxu0 %v207
  %223 = vmatpush1.msra.mxu0 %v206
  %224 = vmatprep.subr.mxu0 0.0
  %225 = vmatpush1.msra.mxu0 0.0
  %226 = vmatprep.subr.mxu0 0.0
  %227 = vmatpush1.msra.mxu0 0.0
  %228 = vmatprep.subr.mxu0 0.0
  %229 = vmatpush1.msra.mxu0 0.0
  %230 = vmatprep.subr.mxu0 0.0
  %231 = vmatpush1.msra.mxu0 0.0
  %232 = vmatprep.subr.mxu0 0.0
  %233 = vmatpush1.msra.mxu0 0.0
  %234 = vmatprep.subr.mxu0 0.0
  %235 = vmatpush1.msra.mxu0 0.0
  %236 = vmatprep.subr.mxu0 0.0
  %237 = vmatpush1.msra.mxu0 0.0
  %238 = vmatprep.subr.mxu0 0.0
  %239 = vmatpush1.msra.mxu0 0.0
  %240 = vmatprep.subr.mxu0 0.0
  %241 = vmatpush1.msra.mxu0 0.0
  %242 = vmatprep.subr.mxu0 0.0
  %243 = vmatpush1.msra.mxu0 0.0
  %244 = vmatprep.subr.mxu0 0.0
  %245 = vmatpush1.msra.mxu0 0.0
  %246 = vmatprep.subr.mxu0 0.0
  %247 = vmatpush1.msra.mxu0 0.0
  %248 = vmatprep.subr.mxu0 0.0
  %249 = vmatpush1.msra.mxu0 0.0
  %250 = vmatprep.subr.mxu0 0.0
  %251 = vmatpush1.msra.mxu0 0.0
  %252 = vmatprep.subr.mxu0 0.0
  %253 = vmatpush1.msra.mxu0 0.0
  %254 = vmatprep.subr.mxu0 0.0
  %255 = vmatpush1.msra.mxu0 0.0
  %256 = vmatprep.subr.mxu0 0.0
  %257 = vmatpush1.msra.mxu0 0.0
  %258 = vmatprep.subr.mxu0 0.0
  %259 = vmatpush1.msra.mxu0 0.0
  %260 = vmatprep.subr.mxu0 0.0
  %261 = vmatpush1.msra.mxu0 0.0
  %262 = vmatprep.subr.mxu0 0.0
  %263 = vmatpush1.msra.mxu0 0.0
  %264 = vmatprep.subr.mxu0 0.0
  %265 = vmatpush1.msra.mxu0 0.0
  %266 = vmatprep.subr.mxu0 0.0
  %267 = vmatpush1.msra.mxu0 0.0
  %268 = vmatprep.subr.mxu0 0.0
  %269 = vmatpush1.msra.mxu0 0.0
  %270 = vmatprep.subr.mxu0 0.0
  %271 = vmatpush1.msra.mxu0 0.0
  %272 = vmatprep.subr.mxu0 0.0
  %273 = vmatpush1.msra.mxu0 0.0
  %274 = vmatprep.subr.mxu0 0.0
  %275 = vmatpush1.msra.mxu0 0.0
  %276 = vmatprep.subr.mxu0 0.0
  %277 = vmatpush1.msra.mxu0 0.0
  %278 = vmatprep.subr.mxu0 0.0
  %279 = vmatpush1.msra.mxu0 0.0
  %280 = vmatprep.subr.mxu0 0.0
  %281 = vmatpush1.msra.mxu0 0.0
  %282 = vmatprep.subr.mxu0 0.0
  %283 = vmatpush1.msra.mxu0 0.0
  %284 = vmatprep.mubr.f32.mxu0 0.0
  %285 = vmatmul.mubr.f32.gmra.mrb[0].mxu0 %v212
  %v286 = vpop.f32.mrb[0].mxu0
  %v287 = vadd.f32 0.0, %v286
  %v288 = vpop.f32.mrb[0].mxu0
  %v289 = vadd.f32 0.0, %v288
  %290 = vmatprep.mubr.f32.mxu0 0.0
  %291 = vmatmul.mubr.f32.gmra.mrb[0].mxu0 %v215
  %v292 = vpop.f32.mrb[0].mxu0
  %v293 = vadd.f32 0.0, %v292
  %v294 = vpop.f32.mrb[0].mxu0
  %v295 = vadd.f32 0.0, %v294
  %296 = vmatprep.mubr.f32.mxu0 0.0
  %297 = vmatmul.mubr.f32.gmra.mrb[0].mxu0 %v218
  %v298 = vpop.f32.mrb[0].mxu0
  %v299 = vadd.f32 0.0, %v298
  %v300 = vpop.f32.mrb[0].mxu0
  %v301 = vadd.f32 0.0, %v300
  %302 = vdwg.mxu0
  %303 = vmatprep.subr.mxu0 %v205
  %304 = vmatpush1.msra.mxu0 %v204
  %305 = vmatprep.subr.mxu0 %v209
  %306 = vmatpush1.msra.mxu0 %v208
  %307 = vmatprep.subr.mxu0 0.0
  %308 = vmatpush1.msra.mxu0 0.0
  %309 = vmatprep.subr.mxu0 0.0
  %310 = vmatpush1.msra.mxu0 0.0
  %311 = vmatprep.subr.mxu0 0.0
  %312 = vmatpush1.msra.mxu0 0.0
  %313 = vmatprep.subr.mxu0 0.0
  %314 = vmatpush1.msra.mxu0 0.0
  %315 = vmatprep.subr.mxu0 0.0
  %316 = vmatpush1.msra.mxu0 0.0
  %317 = vmatprep.subr.mxu0 0.0
  %318 = vmatpush1.msra.mxu0 0.0
  %319 = vmatprep.subr.mxu0 0.0
  %320 = vmatpush1.msra.mxu0 0.0
  %321 = vmatprep.subr.mxu0 0.0
  %322 = vmatpush1.msra.mxu0 0.0
  %323 = vmatprep.subr.mxu0 0.0
  %324 = vmatpush1.msra.mxu0 0.0
  %325 = vmatprep.subr.mxu0 0.0
  %326 = vmatpush1.msra.mxu0 0.0
  %327 = vmatprep.subr.mxu0 0.0
  %328 = vmatpush1.msra.mxu0 0.0
  %329 = vmatprep.subr.mxu0 0.0
  %330 = vmatpush1.msra.mxu0 0.0
  %331 = vmatprep.subr.mxu0 0.0
  %332 = vmatpush1.msra.mxu0 0.0
  %333 = vmatprep.subr.mxu0 0.0
  %334 = vmatpush1.msra.mxu0 0.0
  %335 = vmatprep.subr.mxu0 0.0
  %336 = vmatpush1.msra.mxu0 0.0
  %337 = vmatprep.subr.mxu0 0.0
  %338 = vmatpush1.msra.mxu0 0.0
  %339 = vmatprep.subr.mxu0 0.0
  %340 = vmatpush1.msra.mxu0 0.0
  %341 = vmatprep.subr.mxu0 0.0
  %342 = vmatpush1.msra.mxu0 0.0
  %343 = vmatprep.subr.mxu0 0.0
  %344 = vmatpush1.msra.mxu0 0.0
  %345 = vmatprep.subr.mxu0 0.0
  %346 = vmatpush1.msra.mxu0 0.0
  %347 = vmatprep.subr.mxu0 0.0
  %348 = vmatpush1.msra.mxu0 0.0
  %349 = vmatprep.subr.mxu0 0.0
  %350 = vmatpush1.msra.mxu0 0.0
  %351 = vmatprep.subr.mxu0 0.0
  %352 = vmatpush1.msra.mxu0 0.0
  %353 = vmatprep.subr.mxu0 0.0
  %354 = vmatpush1.msra.mxu0 0.0
  %355 = vmatprep.subr.mxu0 0.0
  %356 = vmatpush1.msra.mxu0 0.0
  %357 = vmatprep.subr.mxu0 0.0
  %358 = vmatpush1.msra.mxu0 0.0
  %359 = vmatprep.subr.mxu0 0.0
  %360 = vmatpush1.msra.mxu0 0.0
  %361 = vmatprep.subr.mxu0 0.0
  %362 = vmatpush1.msra.mxu0 0.0
  %363 = vmatprep.subr.mxu0 0.0
  %364 = vmatpush1.msra.mxu0 0.0
  %365 = vmatprep.subr.mxu0 0.0
  %366 = vmatpush1.msra.mxu0 0.0
  %367 = vmatprep.mubr.f32.mxu0 0.0
  %368 = vmatmul.mubr.f32.gmra.mrb[0].mxu0 %v212
  %v369 = vpop.f32.mrb[0].mxu0
  %v370 = vadd.f32 0.0, %v369
  %v371 = vpop.f32.mrb[0].mxu0
  %v372 = vadd.f32 0.0, %v371
  %373 = vmatprep.mubr.f32.mxu0 0.0
  %374 = vmatmul.mubr.f32.gmra.mrb[0].mxu0 %v215
  %v375 = vpop.f32.mrb[0].mxu0
  %v376 = vadd.f32 0.0, %v375
  %v377 = vpop.f32.mrb[0].mxu0
  %v378 = vadd.f32 0.0, %v377
  %379 = vmatprep.mubr.f32.mxu0 0.0
  %380 = vmatmul.mubr.f32.gmra.mrb[0].mxu0 %v218
  %v381 = vpop.f32.mrb[0].mxu0
  %v382 = vadd.f32 0.0, %v381
  %v383 = vpop.f32.mrb[0].mxu0
  %v384 = vadd.f32 0.0, %v383
  %385 = vdwg.mxu0
  %v386 = vmax.f32 %v287, 0.0
  %v387 = vmax.f32 %v289, 0.0
  %v388 = vmax.f32 %v370, 0.0
  %v389 = vmax.f32 %v372, 0.0
  %v390 = vmax.f32 %v293, 0.0
  %v391 = vmax.f32 %v295, 0.0
  %v392 = vmax.f32 %v376, 0.0
  %v393 = vmax.f32 %v378, 0.0
  %v394 = vmax.f32 %v299, 0.0
  %v395 = vmax.f32 %v301, 0.0
  %v396 = vmax.f32 %v382, 0.0
  %v397 = vmax.f32 %v384, 0.0
  %v398 = vld [vmem:[%s2] sm:$0xff]
  %v399 = vld [vmem:[%s2 + $0x8] sm:$0xff]
  %v400 = vld [vmem:[%s2 + $0x10] sm:$0xff]
  %v401 = vld [vmem:[%s2 + $0x18] sm:$0xff]
  %v402 = vld [vmem:[%s2 + $0x20] sm:$0xff]
  %v403 = vld [vmem:[%s2 + $0x28] sm:$0xff]
  %v404 = vld [vmem:[%s2 + $0x30] sm:$0xff]
  %v405 = vld [vmem:[%s2 + $0x38] sm:$0xff]
  %v406 = vld [vmem:[%s2 + $0x40] sm:$0xff]
  %v407 = vld [vmem:[%s2 + $0x48] sm:$0xff]
  %v408 = vld [vmem:[%s2 + $0x50] sm:$0xff]
  %v409 = vld [vmem:[%s2 + $0x58] sm:$0xff]
  %v410 = vld [vmem:[%s2 + $0x60] sm:$0xff]
  %v411 = vld [vmem:[%s2 + $0x68] sm:$0xff]
  %v412 = vld [vmem:[%s2 + $0x70] sm:$0xff]
  %v413 = vld [vmem:[%s2 + $0x78] sm:$0xff]
  %v414 = vld [vmem:[%s2 + $0x80] sm:$0xff]
  %v415 = vld [vmem:[%s2 + $0x88] sm:$0xff]
  %v416 = vld [vmem:[%s2 + $0x90] sm:$0xff]
  %v417 = vld [vmem:[%s2 + $0x98] sm:$0xff]
  %v418 = vld [vmem:[%s2 + $0xa0] sm:$0xff]
  %v419 = vld [vmem:[%s2 + $0xa8] sm:$0xff]
  %v420 = vld [vmem:[%s2 + $0xb0] sm:$0xff]
  %v421 = vld [vmem:[%s2 + $0xb8] sm:$0xff]
  %v422 = vld [vmem:[%s2 + $0xc0] sm:$0xff]
  %v423 = vld [vmem:[%s2 + $0xc8] sm:$0xff]
  %v424 = vld [vmem:[%s2 + $0xd0] sm:$0xff]
  %v425 = vld [vmem:[%s2 + $0xd8] sm:$0xff]
  %v426 = vld [vmem:[%s2 + $0xe0] sm:$0xff]
  %v427 = vld [vmem:[%s2 + $0xe8] sm:$0xff]
  %v428 = vld [vmem:[%s2 + $0xf0] sm:$0xff]
  %v429 = vld [vmem:[%s2 + $0xf8] sm:$0xff]
  %v430 = vld [vmem:[%s2 + $0x100] sm:$0xff]
  %v431 = vld [vmem:[%s2 + $0x108] sm:$0xff]
  %v432 = vld [vmem:[%s2 + $0x110] sm:$0xff]
  %v433 = vld [vmem:[%s2 + $0x118] sm:$0xff]
  %v434 = vld [vmem:[%s2 + $0x120] sm:$0xff]
  %v435 = vld [vmem:[%s2 + $0x128] sm:$0xff]
  %v436 = vld [vmem:[%s2 + $0x130] sm:$0xff]
  %v437 = vld [vmem:[%s2 + $0x138] sm:$0xff]
  %v438 = vld [vmem:[%s2 + $0x140] sm:$0xff]
  %v439 = vld [vmem:[%s2 + $0x148] sm:$0xff]
  %v440 = vld [vmem:[%s2 + $0x150] sm:$0xff]
  %v441 = vld [vmem:[%s2 + $0x158] sm:$0xff]
  %v442 = vld [vmem:[%s2 + $0x160] sm:$0xff]
  %v443 = vld [vmem:[%s2 + $0x168] sm:$0xff]
  %v444 = vld [vmem:[%s2 + $0x170] sm:$0xff]
  %v445 = vld [vmem:[%s2 + $0x178] sm:$0xff]
  %v446 = vld [vmem:[%s2 + $0x180] sm:$0xff]
  %v447 = vld [vmem:[%s2 + $0x188] sm:$0xff]
  %v448 = vld [vmem:[%s2 + $0x190] sm:$0xff]
  %v449 = vld [vmem:[%s2 + $0x198] sm:$0xff]
  %v450 = vld [vmem:[%s2 + $0x1a0] sm:$0xff]
  %v451 = vld [vmem:[%s2 + $0x1a8] sm:$0xff]
  %v452 = vld [vmem:[%s2 + $0x1b0] sm:$0xff]
  %v453 = vld [vmem:[%s2 + $0x1b8] sm:$0xff]
  %v454 = vld [vmem:[%s2 + $0x1c0] sm:$0xff]
  %v455 = vld [vmem:[%s2 + $0x1c8] sm:$0xff]
  %v456 = vld [vmem:[%s2 + $0x1d0] sm:$0xff]
  %v457 = vld [vmem:[%s2 + $0x1d8] sm:$0xff]
  %v458 = vld [vmem:[%s2 + $0x1e0] sm:$0xff]
  %v459 = vld [vmem:[%s2 + $0x1e8] sm:$0xff]
  %v460 = vld [vmem:[%s2 + $0x1f0] sm:$0xff]
  %v461 = vld [vmem:[%s2 + $0x1f8] sm:$0xff]
  %462 = vmatprep.subr.mxu0 0.0
  %463 = vmatpush1.msra.mxu0 %v398
  %464 = vmatprep.subr.mxu0 0.0
  %465 = vmatpush1.msra.mxu0 %v399
  %466 = vmatprep.subr.mxu0 0.0
  %467 = vmatpush1.msra.mxu0 %v400
  %468 = vmatprep.subr.mxu0 0.0
  %469 = vmatpush1.msra.mxu0 %v401
  %470 = vmatprep.subr.mxu0 0.0
  %471 = vmatpush1.msra.mxu0 %v402
  %472 = vmatprep.subr.mxu0 0.0
  %473 = vmatpush1.msra.mxu0 %v403
  %474 = vmatprep.subr.mxu0 0.0
  %475 = vmatpush1.msra.mxu0 %v404
  %476 = vmatprep.subr.mxu0 0.0
  %477 = vmatpush1.msra.mxu0 %v405
  %478 = vmatprep.subr.mxu0 0.0
  %479 = vmatpush1.msra.mxu0 %v406
  %480 = vmatprep.subr.mxu0 0.0
  %481 = vmatpush1.msra.mxu0 %v407
  %482 = vmatprep.subr.mxu0 0.0
  %483 = vmatpush1.msra.mxu0 %v408
  %484 = vmatprep.subr.mxu0 0.0
  %485 = vmatpush1.msra.mxu0 %v409
  %486 = vmatprep.subr.mxu0 0.0
  %487 = vmatpush1.msra.mxu0 %v410
  %488 = vmatprep.subr.mxu0 0.0
  %489 = vmatpush1.msra.mxu0 %v411
  %490 = vmatprep.subr.mxu0 0.0
  %491 = vmatpush1.msra.mxu0 %v412
  %492 = vmatprep.subr.mxu0 0.0
  %493 = vmatpush1.msra.mxu0 %v413
  %494 = vmatprep.subr.mxu0 0.0
  %495 = vmatpush1.msra.mxu0 %v414
  %496 = vmatprep.subr.mxu0 0.0
  %497 = vmatpush1.msra.mxu0 %v415
  %498 = vmatprep.subr.mxu0 0.0
  %499 = vmatpush1.msra.mxu0 %v416
  %500 = vmatprep.subr.mxu0 0.0
  %501 = vmatpush1.msra.mxu0 %v417
  %502 = vmatprep.subr.mxu0 0.0
  %503 = vmatpush1.msra.mxu0 %v418
  %504 = vmatprep.subr.mxu0 0.0
  %505 = vmatpush1.msra.mxu0 %v419
  %506 = vmatprep.subr.mxu0 0.0
  %507 = vmatpush1.msra.mxu0 %v420
  %508 = vmatprep.subr.mxu0 0.0
  %509 = vmatpush1.msra.mxu0 %v421
  %510 = vmatprep.subr.mxu0 0.0
  %511 = vmatpush1.msra.mxu0 %v422
  %512 = vmatprep.subr.mxu0 0.0
  %513 = vmatpush1.msra.mxu0 %v423
  %514 = vmatprep.subr.mxu0 0.0
  %515 = vmatpush1.msra.mxu0 %v424
  %516 = vmatprep.subr.mxu0 0.0
  %517 = vmatpush1.msra.mxu0 %v425
  %518 = vmatprep.subr.mxu0 0.0
  %519 = vmatpush1.msra.mxu0 %v426
  %520 = vmatprep.subr.mxu0 0.0
  %521 = vmatpush1.msra.mxu0 %v427
  %522 = vmatprep.subr.mxu0 0.0
  %523 = vmatpush1.msra.mxu0 %v428
  %524 = vmatprep.subr.mxu0 0.0
  %525 = vmatpush1.msra.mxu0 %v429
  %526 = vmatprep.mubr.f32.mxu0 %v387
  %527 = vmatmul.mubr.f32.gmra.mrb[0].mxu0 %v386
  %v528 = vpop.f32.mrb[0].mxu0
  %v529 = vadd.f32 0.0, %v528
  %v530 = vpop.f32.mrb[0].mxu0
  %531 = vmatprep.mubr.f32.mxu0 %v391
  %532 = vmatmul.mubr.f32.gmra.mrb[0].mxu0 %v390
  %v533 = vpop.f32.mrb[0].mxu0
  %v534 = vadd.f32 0.0, %v533
  %v535 = vpop.f32.mrb[0].mxu0
  %536 = vmatprep.mubr.f32.mxu0 %v395
  %537 = vmatmul.mubr.f32.gmra.mrb[0].mxu0 %v394
  %v538 = vpop.f32.mrb[0].mxu0
  %v539 = vadd.f32 0.0, %v538
  %v540 = vpop.f32.mrb[0].mxu0
  %541 = vdwg.mxu0
  %542 = vmatprep.subr.mxu0 0.0
  %543 = vmatpush1.msra.mxu0 %v430
  %544 = vmatprep.subr.mxu0 0.0
  %545 = vmatpush1.msra.mxu0 %v431
  %546 = vmatprep.subr.mxu0 0.0
  %547 = vmatpush1.msra.mxu0 %v432
  %548 = vmatprep.subr.mxu0 0.0
  %549 = vmatpush1.msra.mxu0 %v433
  %550 = vmatprep.subr.mxu0 0.0
  %551 = vmatpush1.msra.mxu0 %v434
  %552 = vmatprep.subr.mxu0 0.0
  %553 = vmatpush1.msra.mxu0 %v435
  %554 = vmatprep.subr.mxu0 0.0
  %555 = vmatpush1.msra.mxu0 %v436
  %556 = vmatprep.subr.mxu0 0.0
  %557 = vmatpush1.msra.mxu0 %v437
  %558 = vmatprep.subr.mxu0 0.0
  %559 = vmatpush1.msra.mxu0 %v438
  %560 = vmatprep.subr.mxu0 0.0
  %561 = vmatpush1.msra.mxu0 %v439
  %562 = vmatprep.subr.mxu0 0.0
  %563 = vmatpush1.msra.mxu0 %v440
  %564 = vmatprep.subr.mxu0 0.0
  %565 = vmatpush1.msra.mxu0 %v441
  %566 = vmatprep.subr.mxu0 0.0
  %567 = vmatpush1.msra.mxu0 %v442
  %568 = vmatprep.subr.mxu0 0.0
  %569 = vmatpush1.msra.mxu0 %v443
  %570 = vmatprep.subr.mxu0 0.0
  %571 = vmatpush1.msra.mxu0 %v444
  %572 = vmatprep.subr.mxu0 0.0
  %573 = vmatpush1.msra.mxu0 %v445
  %574 = vmatprep.subr.mxu0 0.0
  %575 = vmatpush1.msra.mxu0 %v446
  %576 = vmatprep.subr.mxu0 0.0
  %577 = vmatpush1.msra.mxu0 %v447
  %578 = vmatprep.subr.mxu0 0.0
  %579 = vmatpush1.msra.mxu0 %v448
  %580 = vmatprep.subr.mxu0 0.0
  %581 = vmatpush1.msra.mxu0 %v449
  %582 = vmatprep.subr.mxu0 0.0
  %583 = vmatpush1.msra.mxu0 %v450
  %584 = vmatprep.subr.mxu0 0.0
  %585 = vmatpush1.msra.mxu0 %v451
  %586 = vmatprep.subr.mxu0 0.0
  %587 = vmatpush1.msra.mxu0 %v452
  %588 = vmatprep.subr.mxu0 0.0
  %589 = vmatpush1.msra.mxu0 %v453
  %590 = vmatprep.subr.mxu0 0.0
  %591 = vmatpush1.msra.mxu0 %v454
  %592 = vmatprep.subr.mxu0 0.0
  %593 = vmatpush1.msra.mxu0 %v455
  %594 = vmatprep.subr.mxu0 0.0
  %595 = vmatpush1.msra.mxu0 %v456
  %596 = vmatprep.subr.mxu0 0.0
  %597 = vmatpush1.msra.mxu0 %v457
  %598 = vmatprep.subr.mxu0 0.0
  %599 = vmatpush1.msra.mxu0 %v458
  %600 = vmatprep.subr.mxu0 0.0
  %601 = vmatpush1.msra.mxu0 %v459
  %602 = vmatprep.subr.mxu0 0.0
  %603 = vmatpush1.msra.mxu0 %v460
  %604 = vmatprep.subr.mxu0 0.0
  %605 = vmatpush1.msra.mxu0 %v461
  %606 = vmatprep.mubr.f32.mxu0 %v389
  %607 = vmatmul.mubr.f32.gmra.mrb[0].mxu0 %v388
  %v608 = vpop.f32.mrb[0].mxu0
  %v609 = vadd.f32 %v529, %v608
  %v610 = vpop.f32.mrb[0].mxu0
  %611 = vmatprep.mubr.f32.mxu0 %v393
  %612 = vmatmul.mubr.f32.gmra.mrb[0].mxu0 %v392
  %v613 = vpop.f32.mrb[0].mxu0
  %v614 = vadd.f32 %v534, %v613
  %v615 = vpop.f32.mrb[0].mxu0
  %616 = vmatprep.mubr.f32.mxu0 %v397
  %617 = vmatmul.mubr.f32.gmra.mrb[0].mxu0 %v396
  %v618 = vpop.f32.mrb[0].mxu0
  %v619 = vadd.f32 %v539, %v618
  %v620 = vpop.f32.mrb[0].mxu0
  %621 = vdwg.mxu0
  %vm622 = vcmask 195584
  %v624 = vsel %vm622, %v19, 0
  %v627 = vsel %vm622, %v20, 0
  %629 = vmatprep.subr.mxu0 0.0
  %630 = vmatpush1.msra.mxu0 %v609
  %631 = vmatprep.subr.mxu0 0.0
  %632 = vmatpush1.msra.mxu0 %v614
  %633 = vmatprep.subr.mxu0 0.0
  %634 = vmatpush1.msra.mxu0 %v619
  %635 = vmatprep.subr.mxu0 0.0
  %636 = vmatpush1.msra.mxu0 0.0
  %637 = vmatprep.subr.mxu0 0.0
  %638 = vmatpush1.msra.mxu0 0.0
  %639 = vmatprep.subr.mxu0 0.0
  %640 = vmatpush1.msra.mxu0 0.0
  %641 = vmatprep.subr.mxu0 0.0
  %642 = vmatpush1.msra.mxu0 0.0
  %643 = vmatprep.subr.mxu0 0.0
  %644 = vmatpush1.msra.mxu0 0.0
  %645 = vmatprep.subr.mxu0 0.0
  %646 = vmatpush1.msra.mxu0 0.0
  %647 = vmatprep.subr.mxu0 0.0
  %648 = vmatpush1.msra.mxu0 0.0
  %649 = vmatprep.subr.mxu0 0.0
  %650 = vmatpush1.msra.mxu0 0.0
  %651 = vmatprep.subr.mxu0 0.0
  %652 = vmatpush1.msra.mxu0 0.0
  %653 = vmatprep.subr.mxu0 0.0
  %654 = vmatpush1.msra.mxu0 0.0
  %655 = vmatprep.subr.mxu0 0.0
  %656 = vmatpush1.msra.mxu0 0.0
  %657 = vmatprep.subr.mxu0 0.0
  %658 = vmatpush1.msra.mxu0 0.0
  %659 = vmatprep.subr.mxu0 0.0
  %660 = vmatpush1.msra.mxu0 0.0
  %661 = vmatprep.subr.mxu0 0.0
  %662 = vmatpush1.msra.mxu0 0.0
  %663 = vmatprep.subr.mxu0 0.0
  %664 = vmatpush1.msra.mxu0 0.0
  %665 = vmatprep.subr.mxu0 0.0
  %666 = vmatpush1.msra.mxu0 0.0
  %667 = vmatprep.subr.mxu0 0.0
  %668 = vmatpush1.msra.mxu0 0.0
  %669 = vmatprep.subr.mxu0 0.0
  %670 = vmatpush1.msra.mxu0 0.0
  %671 = vmatprep.subr.mxu0 0.0
  %672 = vmatpush1.msra.mxu0 0.0
  %673 = vmatprep.subr.mxu0 0.0
  %674 = vmatpush1.msra.mxu0 0.0
  %675 = vmatprep.subr.mxu0 0.0
  %676 = vmatpush1.msra.mxu0 0.0
  %677 = vmatprep.subr.mxu0 0.0
  %678 = vmatpush1.msra.mxu0 0.0
  %679 = vmatprep.subr.mxu0 0.0
  %680 = vmatpush1.msra.mxu0 0.0
  %681 = vmatprep.subr.mxu0 0.0
  %682 = vmatpush1.msra.mxu0 0.0
  %683 = vmatprep.subr.mxu0 0.0
  %684 = vmatpush1.msra.mxu0 0.0
  %685 = vmatprep.subr.mxu0 0.0
  %686 = vmatpush1.msra.mxu0 0.0
  %687 = vmatprep.subr.mxu0 0.0
  %688 = vmatpush1.msra.mxu0 0.0
  %689 = vmatprep.subr.mxu0 0.0
  %690 = vmatpush1.msra.mxu0 0.0
  %691 = vmatprep.subr.mxu0 0.0
  %692 = vmatpush1.msra.mxu0 0.0
  %693 = vmatprep.mubr.f32.mxu0 0.0
  %694 = vmatmul.mubr.f32.gmra.mrb[0].mxu0 %v624
  %v695 = vpop.f32.mrb[0].mxu0
  %v696 = vadd.f32 0.0, %v695
  %v697 = vpop.f32.mrb[0].mxu0
  %698 = vmatprep.mubr.f32.mxu0 0.0
  %699 = vmatmul.mubr.f32.gmra.mrb[0].mxu0 %v627
  %v700 = vpop.f32.mrb[0].mxu0
  %v701 = vadd.f32 0.0, %v700
  %v702 = vpop.f32.mrb[0].mxu0
  %703 = vdwg.mxu0
  %vm704 = vcmask 15360
  %705 = vst.msk [vmem:[%s3] sm:$0xff] %vm704, %v696
  %vm706 = vcmask 9216
  %707 = vst.msk [vmem:[%s3 + $0x8] sm:$0x3] %vm706, %v701
  // Predicated region
  $region14: #{gmodel_forward.1} parent=0 // pred_check
    _
  $region15: #{gmodel_forward.1} parent=0 // pred_check_branch
    %709 = sbr.rel (0) target = $region17
  $region16: #{gmodel_forward.1} parent=0 // pred_region
    _
  $region17: #{gmodel_forward.1} parent=0 // pred_fallthru
    _
  // Predicated region
  $region18: #{gmodel_forward.1} parent=0 // pred_check
    _
  $region19: #{gmodel_forward.1} parent=0 // pred_check_branch
    %711 = sbr.rel (0) target = $region21
  $region20: #{gmodel_forward.1} parent=0 // pred_region
    _
  $region21: #{gmodel_forward.1} parent=0 // pred_fallthru
    _

</llo_original>
